<compile_context>
chip_gen: v7x
topology: tpu7x:2x2x1
jax: 0.10.0
libtpu: 0.0.40
codegen_flags: <defaults>
</compile_context>

<pallas_src>
import math
import functools

import jax
import jax.numpy as jnp
from jax.experimental import pallas as pl
from jax.experimental.pallas import tpu as pltpu


# ---------------------------------------------------------------------------
# Parameter setup (plain JAX glue): sinusoidal table, built once like extend_pe.
# ---------------------------------------------------------------------------
def make_positional_encoding(max_len: int, d_model: int, dtype=jnp.float32):
    """Build the (1, max_len, d_model) sinusoidal table exactly like extend_pe."""
    position = jnp.arange(0, max_len, dtype=jnp.float32)[:, None]            # (max_len, 1)
    div_term = jnp.exp(
        jnp.arange(0, d_model, 2, dtype=jnp.float32)
        * -(math.log(10000.0) / d_model)
    )                                                                         # (d_model//2,)
    angles = position * div_term                                              # (max_len, d_model//2)
    pe = jnp.zeros((max_len, d_model), dtype=jnp.float32)
    pe = pe.at[:, 0::2].set(jnp.sin(angles))
    pe = pe.at[:, 1::2].set(jnp.cos(angles))
    return pe[None, :, :].astype(dtype)                                       # (1, max_len, d_model)


# ---------------------------------------------------------------------------
# Kernel: streaming elementwise  out = x * xscale + pe   (pe broadcast over batch)
# ---------------------------------------------------------------------------
def _pe_add_kernel(x_ref, pe_ref, o_ref, *, xscale):
    # Stay in x's dtype (no upcast): kernel is HBM-bound, bytes moved is the cost.
    o_ref[...] = x_ref[...] * xscale + pe_ref[...]


def _lane_dense_views(x, pe, T, D, max_len):
    """Return lane-dense (B, rows, lanes) views of x and pe (reshapes are free bitcasts)."""
    B = x.shape[0]
    if D % 128 == 0:
        # Already lane-dense: window into the full pe table (no wrapper-side slice copy).
        return x, pe, T, max_len, D
    if (T * D) % 128 == 0:
        rows = (T * D) // 128
        x2 = x.reshape(B, rows, 128)
        if (max_len * D) % 128 == 0:
            return x2, pe.reshape(1, (max_len * D) // 128, 128), rows, (max_len * D) // 128, 128
        # pe table itself can't be reshaped whole: slice the needed window first.
        return x2, pe[:, :T, :].reshape(1, rows, 128), rows, rows, 128
    # Ragged fallback (rare): correct, but lane-sparse (masked) stores.
    return x, pe, T, max_len, D


def positional_encoding_forward(
    x: jax.Array,
    pe: jax.Array,
    d_model: int,
    *,
    tile_rows: int | None = None,
    tile_bytes: int = 1 << 20,          # ~1 MiB slabs: ~85% of HBM roofline, VMEM-safe on v7x
    min_pallas_elements: int = 1 << 15, # below this, let XLA fuse the scale+add for free
    donate_x: bool = False,             # alias x -> out (only if the caller drops x)
) -> jax.Array:
    """x: (B, T, D); pe: (1, max_len, D) with max_len >= T. Returns (B, T, D)."""
    B, T, D = x.shape
    assert D == d_model
    assert pe.shape[0] == 1 and pe.shape[1] >= T and pe.shape[2] == D
    xscale = math.sqrt(d_model)
    pe = pe.astype(x.dtype)

    if B * T * D < min_pallas_elements:
        # Tiny inputs: pallas_call launch + per-step overhead dominates.
        return x * xscale + pe[:, :T, :]

    x2, pe2, rows, pe_rows, lanes = _lane_dense_views(x, pe, T, D, pe.shape[1])
    itemsize = jnp.dtype(x.dtype).itemsize

    # ---- choose an 8-sublane-aligned row tile targeting ~tile_bytes per block ----
    if rows < 8:
        tile_rows = rows
    else:
        if tile_rows is None:
            tile_rows = max(8, (tile_bytes // (lanes * itemsize)) // 8 * 8)
        tile_rows = int(tile_rows)
        if tile_rows >= rows:
            tile_rows = rows if rows % 8 == 0 else (rows // 8) * 8
        else:
            tile_rows = max(8, (tile_rows // 8) * 8)

    if rows < 8 and pe_rows != rows:
        # Tiny slab whose row count isn't 8-divisible: slice pe so its block equals
        # full dims (only hit for very small / ragged shapes; slice cost negligible).
        pe2 = pe2[:, :rows, :]
        pe_rows = rows

    num_row_tiles = pl.cdiv(rows, tile_rows)
    grid = (num_row_tiles, B)  # batch innermost -> pe block index constant -> pe stays in VMEM

    # Double-buffered VMEM budget: 2 bufs x (x + pe + out) x tile; bounded explicitly
    # so the same tiling is safe on v7x's 64 MiB VMEM as well as v5e/v6e's 128 MiB.
    tile_block_bytes = tile_rows * lanes * itemsize
    vmem_limit = int(min(32 * 2**20, max(4 * 2**20, 8 * tile_block_bytes)))

    kernel = functools.partial(_pe_add_kernel, xscale=xscale)

    out2 = pl.pallas_call(
        kernel,
        out_shape=jax.ShapeDtypeStruct((B, rows, lanes), x.dtype),
        grid_spec=pltpu.PrefetchScalarGridSpec(
            num_scalar_prefetch=0,
            grid=grid,
            in_specs=[
                # x: one (tile_rows, lanes) slab of one batch element per step.
                pl.BlockSpec((1, tile_rows, lanes), lambda r, b: (b, r, 0)),
                # pe: block index depends only on the row tile -> resident across batch.
                pl.BlockSpec((1, tile_rows, lanes), lambda r, b: (0, r, 0)),
            ],
            out_specs=pl.BlockSpec((1, tile_rows, lanes), lambda r, b: (b, r, 0)),
        ),
        compiler_params=pltpu.CompilerParams(
            dimension_semantics=("parallel", "arbitrary"),
            vmem_limit_bytes=vmem_limit,
        ),
        input_output_aliases=({0: 0} if donate_x else {}),
    )(x2, pe2)

    return out2.reshape(B, T, D)


if __name__ == "__main__":
    key = jax.random.PRNGKey(0)
    k1, k2 = jax.random.split(key)

    # --- main check: lane-dense d_model, multiple row tiles, pe window (no slice) ---
    B, T, D, MAX_LEN = 2, 256, 128, 512
    x = jax.random.normal(k1, (B, T, D), dtype=jnp.float32)
    pe = make_positional_encoding(MAX_LEN, D, dtype=x.dtype)
    out = positional_encoding_forward(x, pe, d_model=D, tile_rows=64,
                                      min_pallas_elements=0)
    out = jax.block_until_ready(out)
    ref = x * math.sqrt(D) + pe[:, :T, :]
    assert out.shape == (B, T, D)
    assert jnp.allclose(out, ref, atol=1e-5, rtol=1e-5)

    # --- tiny lane-sparse d_model: wrapper collapses (T, D) -> (T*D/128, 128) ---
    B2, T2, D2, MAX2 = 2, 8, 32, 64
    x_small = jax.random.normal(k2, (B2, T2, D2), dtype=jnp.float32)
    pe_small = make_positional_encoding(MAX2, D2, dtype=x_small.dtype)
    out_small = positional_encoding_forward(x_small, pe_small, d_model=D2,
                                            min_pallas_elements=0)
    out_small = jax.block_until_ready(out_small)
    ref_small = x_small * math.sqrt(D2) + pe_small[:, :T2, :]
    assert jnp.allclose(out_small, ref_small, atol=1e-5, rtol=1e-5)

    print("KERNEL_OK")
</pallas_src>

<mosaic_0001>
module attributes {stable_mosaic.version = 11 : i64} {
  func.func @_pe_add_kernel(%arg0: i32, %arg1: i32, %arg2: memref<1x64x128xf32, #tpu.memory_space<vmem>>, %arg3: memref<1x64x128xf32, #tpu.memory_space<vmem>>, %arg4: memref<1x64x128xf32, #tpu.memory_space<vmem>>) attributes {dimension_semantics = [#tpu.dimension_semantics<parallel>, #tpu.dimension_semantics<arbitrary>], iteration_bounds = array<i64: 4, 2>, scalar_prefetch = 0 : i64, scratch_operands = 0 : i64, tpu.core_type = #tpu.core_type<tc>, window_params = [{transform_indices = @transform_0, window_bounds = array<i64: 1, 64, 128>}, {transform_indices = @transform_1, window_bounds = array<i64: 1, 64, 128>}, {transform_indices = @transform_2, window_bounds = array<i64: 1, 64, 128>}]} {
    %c0 = arith.constant 0 : index
    %c0_0 = arith.constant 0 : index
    %c0_1 = arith.constant 0 : index
    %0 = vector.load %arg2[%c0, %c0_0, %c0_1] : memref<1x64x128xf32, #tpu.memory_space<vmem>>, vector<1x64x128xf32>
    %cst = arith.constant 11.3137083 : f32
    %1 = vector.broadcast %cst : f32 to vector<1x64x128xf32>
    %2 = arith.mulf %0, %1 : vector<1x64x128xf32>
    %c0_2 = arith.constant 0 : index
    %c0_3 = arith.constant 0 : index
    %c0_4 = arith.constant 0 : index
    %3 = vector.load %arg3[%c0_2, %c0_3, %c0_4] : memref<1x64x128xf32, #tpu.memory_space<vmem>>, vector<1x64x128xf32>
    %4 = arith.addf %2, %3 : vector<1x64x128xf32>
    %c0_5 = arith.constant 0 : index
    %c0_6 = arith.constant 0 : index
    %c0_7 = arith.constant 0 : index
    %5 = vector.load %arg4[%c0_5, %c0_6, %c0_7] : memref<1x64x128xf32, #tpu.memory_space<vmem>>, vector<1x64x128xf32>
    tpu.vector_store %arg4[%c0_5, %c0_6, %c0_7], %4 {strides = array<i32>} : memref<1x64x128xf32, #tpu.memory_space<vmem>>, vector<1x64x128xf32>,
    return
  }
  func.func @transform_0(%arg0: i32, %arg1: i32) -> (i32, i32, i32) {
    %c0_i32 = arith.constant 0 : i32
    %c0_i32_0 = arith.constant 0 : i32
    return %arg1, %arg0, %c0_i32 : i32, i32, i32
  }
  func.func @transform_1(%arg0: i32, %arg1: i32) -> (i32, i32, i32) {
    %c0_i32 = arith.constant 0 : i32
    %c0_i32_0 = arith.constant 0 : i32
    %c0_i32_1 = arith.constant 0 : i32
    return %c0_i32, %arg0, %c0_i32_0 : i32, i32, i32
  }
  func.func @transform_2(%arg0: i32, %arg1: i32) -> (i32, i32, i32) {
    %c0_i32 = arith.constant 0 : i32
    %c0_i32_0 = arith.constant 0 : i32
    return %arg1, %arg0, %c0_i32 : i32, i32, i32
  }
}

</mosaic_0001>

<llo_original>
// kernel: tpu_custom_call.1
$region0: #{tpu_custom_call.1}
  #allocation0 [shape = 'u32[]', space=smem, size = 0x4, offset = 0x4, fixed_abs, tag = 'smem constant byte address 0x4 - core index']
  #allocation1 [shape = 'u32[144,128]{1,0:T(1,128)}', space=vmem, size = 0x12000, scoped, tag = 'internal scratch']
  %s0 = inlined_call_operand.hbm [shape: f32[2,256,128], index: 0, kind: input, shape index: {}]
  %s1 = inlined_call_operand.hbm [shape: f32[1,512,128], index: 1, kind: input, shape index: {}]
  %s2 = inlined_call_operand.hbm [shape: f32[2,256,128], index: 2, kind: output, shape index: {}]
  %s3 = sld [smem:[#allocation0]]
  $region49: #{tpu_custom_call.1} parent=0
    _
  %s5 = ssub.s32 1, %s3
  %s6 = scalar_select 0, %s5, %s3
  $region1: #{tpu_custom_call.1} parent=0
    #allocation2 [shape = 'u8[65536]{0}', space=vmem, size = 0x10000, scoped, tag = 'input window, operand 0']
    #allocation3 [shape = 's32[2]{0}', space=sflag, size = 0x8, scoped, tag = 'scoped memory for tpu_custom_call.1']
    #allocation4 [shape = 's32[2]{0}', space=sflag, size = 0x8, scoped, tag = 'scoped memory for tpu_custom_call.1']
    #allocation5 [shape = 'u8[65536]{0}', space=vmem, size = 0x10000, scoped, tag = 'input window, operand 1']
    #allocation6 [shape = 's32[2]{0}', space=sflag, size = 0x8, scoped, tag = 'scoped memory for tpu_custom_call.1']
    #allocation7 [shape = 'u8[65536]{0}', space=vmem, size = 0x10000, scoped, tag = 'output window, operand 0']
    %7 = vsyncpa [#allocation3], 0
    %s8 = scalar_lea.sflag [#allocation3], 1
    %9 = vsyncpa %s8, 0
    %10 = vsyncpa [#allocation6], 0
    %s11 = scalar_lea.sflag [#allocation6], 1
    %12 = vsyncpa %s11, 0
    %13 = vsyncpa [#allocation4], 0
    %s14 = scalar_lea.sflag [#allocation4], 1
    %15 = vsyncpa %s14, 0
    loop: start=0, step=1, limit=10
    $region2: #{tpu_custom_call.1} parent=1 // loop_pre_header
      _
    $region3: #{tpu_custom_call.1} parent=1 // loop_header
      %s17 = sphi 0, %s21
      %p18 = scmp.ge.s32.totalorder %s17, 10
      %s24 = sphi 0, %s36
      %s25 = sphi 0, %s32
      %s26 = sphi 0, %s24
      %s27 = sphi 0, %s25
      %s28 = sphi 0, %s26
      %s29 = sphi 0, %s27
      %s41 = sphi 0, %s43
      %s44 = sphi 0, %s41
      %s45 = sphi 0, %s44
      %s61 = sphi 0, %s45
      %s67 = sphi 0, %s69
      %s70 = sphi 0, %s67
      %s71 = sphi 0, %s70
      %s87 = sphi 0, %s71
      %s95 = sphi 0, %s97
      %s98 = sphi 0, %s95
      %s99 = sphi 0, %s98
      %s115 = sphi 0, %s99
    $region4: #{tpu_custom_call.1} parent=1 // loop_header_branch
      %20 = sbr.rel (%p18) target = $region8
    $region5: #{tpu_custom_call.1} parent=1 // loop_body
      %s22 = ssub.s32 %s17, 1
      %s23 = ssub.s32 %s17, 2
      %s30 = sadd.s32 1, %s25
      %p31 = scmp.ge.s32.totalorder %s30, 2
      %s32 = scalar_select %p31, 0, %s30
      %s33 = sadd.s32 1, %s24
      %s34 = scalar_select %p31, %s33, %s24
      %p35 = scmp.ge.s32.totalorder %s34, 4
      %s36 = scalar_select %p35, 0, %s34
      %s37 = ssub.s32 %s25, %s32
      %s38 = ssub.s32 %s24, %s36
      %s39 = sor.u32 %s37, %s38
      %p40 = scmp.eq.s32.totalorder %s39, 0
      %s42 = sadd.s32 %s41, 1
      %s43 = scalar_select %p40, %s41, %s42
      %p46 = pneg %p40
      %p47 = scmp.eq.s32.totalorder %s17, 7
      %p48 = por %p46, %p47
      %p49 = scmp.ne.s32.totalorder %s41, %s44
      %p50 = scmp.eq.s32.totalorder %s17, 0
      %p51 = por %p49, %p50
      %p52 = scmp.ne.s32.totalorder %s41, %s44
      %p53 = scmp.eq.s32.totalorder %s22, 7
      %p54 = por %p52, %p53
      %p55 = scmp.ne.s32.totalorder %s44, %s45
      %p56 = scmp.eq.s32.totalorder %s22, 0
      %p57 = por %p55, %p56
      %p58 = scmp.ne.s32.totalorder %s44, %s45
      %p59 = scmp.eq.s32.totalorder %s23, 7
      %p60 = por %p58, %p59
      %p62 = scmp.ne.s32.totalorder %s45, %s61
      %p63 = scmp.eq.s32.totalorder %s23, 0
      %p64 = por %p62, %p63
      %s65 = ssub.s32 %s24, %s36
      %p66 = scmp.eq.s32.totalorder %s65, 0
      %s68 = sadd.s32 %s67, 1
      %s69 = scalar_select %p66, %s67, %s68
      %p72 = pneg %p66
      %p73 = scmp.eq.s32.totalorder %s17, 7
      %p74 = por %p72, %p73
      %p75 = scmp.ne.s32.totalorder %s67, %s70
      %p76 = scmp.eq.s32.totalorder %s17, 0
      %p77 = por %p75, %p76
      %p78 = scmp.ne.s32.totalorder %s67, %s70
      %p79 = scmp.eq.s32.totalorder %s22, 7
      %p80 = por %p78, %p79
      %p81 = scmp.ne.s32.totalorder %s70, %s71
      %p82 = scmp.eq.s32.totalorder %s22, 0
      %p83 = por %p81, %p82
      %p84 = scmp.ne.s32.totalorder %s70, %s71
      %p85 = scmp.eq.s32.totalorder %s23, 7
      %p86 = por %p84, %p85
      %p88 = scmp.ne.s32.totalorder %s71, %s87
      %p89 = scmp.eq.s32.totalorder %s23, 0
      %p90 = por %p88, %p89
      %s91 = ssub.s32 %s25, %s32
      %s92 = ssub.s32 %s24, %s36
      %s93 = sor.u32 %s91, %s92
      %p94 = scmp.eq.s32.totalorder %s93, 0
      %s96 = sadd.s32 %s95, 1
      %s97 = scalar_select %p94, %s95, %s96
      %p100 = pneg %p94
      %p101 = scmp.eq.s32.totalorder %s17, 7
      %p102 = por %p100, %p101
      %p103 = scmp.ne.s32.totalorder %s95, %s98
      %p104 = scmp.eq.s32.totalorder %s17, 0
      %p105 = por %p103, %p104
      %p106 = scmp.ne.s32.totalorder %s95, %s98
      %p107 = scmp.eq.s32.totalorder %s22, 7
      %p108 = por %p106, %p107
      %p109 = scmp.ne.s32.totalorder %s98, %s99
      %p110 = scmp.eq.s32.totalorder %s22, 0
      %p111 = por %p109, %p110
      %p112 = scmp.ne.s32.totalorder %s98, %s99
      %p113 = scmp.eq.s32.totalorder %s23, 7
      %p114 = por %p112, %p113
      %p116 = scmp.ne.s32.totalorder %s99, %s115
      %p117 = scmp.eq.s32.totalorder %s23, 0
      %p118 = por %p116, %p117
      %p119 = scmp.le.s32.totalorder 1, %s17
      %p120 = scmp.lt.s32.totalorder %s17, 9
      %p121 = pnand %p119, %p120
      %p122 = pneg %p121
      // Predicated region
      $region9: #{tpu_custom_call.1} parent=5 // pred_check
        _
      $region10: #{tpu_custom_call.1} parent=5 // pred_check_branch
        %124 = sbr.rel (%p121) target = $region12
      $region11: #{tpu_custom_call.1} parent=5 // pred_region
        %s125 = ssub.s32 %s17, 1
      $region12: #{tpu_custom_call.1} parent=5 // pred_fallthru
        _
      %p126 = scmp.lt.s32.totalorder %s17, 8
      // Predicated region
      $region13: #{tpu_custom_call.1} parent=5 // pred_check
        %p127 = pneg %p126
      $region14: #{tpu_custom_call.1} parent=5 // pred_check_branch
        %129 = sbr.rel (%p127) target = $region16
      $region15: #{tpu_custom_call.1} parent=5 // pred_region
        // Predicated region
        $region17: #{tpu_custom_call.1} parent=15 // pred_check
          %p130 = pneg %p51
        $region18: #{tpu_custom_call.1} parent=15 // pred_check_branch
          %132 = sbr.rel (%p130) target = $region20
        $region19: #{tpu_custom_call.1} parent=15 // pred_region
          %s133 = sand.u32 %s41, 1
          %s134 = scalar_lea.sflag [#allocation3], %s133
          %s135 = sand.u32 %s41, 1
          %s136 = smul.addr %s135, 64
          %s137 = scalar_lea.vmem [#allocation2], %s136
          %s138 = smul.u32 8, %s24
          %s140 = ssub.s32 1024, 1024
          %141 = vsyncadd %s134, %s140
          %s142 = smul.addr %s25, 32
          %s143 = sadd.s32 %s138, %s142
          %s144 = smul.addr %s143, 128
          %s145 = scalar_lea.hbm %s0, %s144
          %s146 = sshll.u32 %s137, 4
          %s147 = int_to_ptr.vmem [resolvable:$true] %s146
          %152 = dma.hbm_to_vmem [thread:$0]  %s145, 1024, %s147, %s134, 128, 128, 8
        $region20: #{tpu_custom_call.1} parent=15 // pred_fallthru
          _
        // Predicated region
        $region21: #{tpu_custom_call.1} parent=15 // pred_check
          %p153 = pneg %p77
        $region22: #{tpu_custom_call.1} parent=15 // pred_check_branch
          %155 = sbr.rel (%p153) target = $region24
        $region23: #{tpu_custom_call.1} parent=15 // pred_region
          %s156 = sand.u32 %s67, 1
          %s157 = scalar_lea.sflag [#allocation6], %s156
          %s158 = sand.u32 %s67, 1
          %s159 = smul.addr %s158, 64
          %s160 = scalar_lea.vmem [#allocation5], %s159
          %s161 = smul.u32 8, %s24
          %s163 = ssub.s32 1024, 1024
          %164 = vsyncadd %s157, %s163
          %s165 = smul.addr %s161, 128
          %s166 = scalar_lea.hbm %s1, %s165
          %s167 = sshll.u32 %s160, 4
          %s168 = int_to_ptr.vmem [resolvable:$true] %s167
          %173 = dma.hbm_to_vmem [thread:$0]  %s166, 1024, %s168, %s157, 128, 128, 8
        $region24: #{tpu_custom_call.1} parent=15 // pred_fallthru
          _
      $region16: #{tpu_custom_call.1} parent=5 // pred_fallthru
        _
      %p174 = scmp.le.s32.totalorder 1, %s17
      %p175 = scmp.lt.s32.totalorder %s17, 9
      %p176 = pnand %p174, %p175
      %p177 = pneg %p176
      // Predicated region
      $region25: #{tpu_custom_call.1} parent=5 // pred_check
        _
      $region26: #{tpu_custom_call.1} parent=5 // pred_check_branch
        %179 = sbr.rel (%p176) target = $region28
      $region27: #{tpu_custom_call.1} parent=5 // pred_region
        %s180 = ssub.s32 %s17, 1
        %s181 = sand.u32 %s44, 1
        %s182 = scalar_lea.sflag [#allocation3], %s181
        %s183 = sand.u32 %s44, 1
        %s184 = smul.addr %s183, 64
        %s185 = scalar_lea.vmem [#allocation2], %s184
        // Predicated region
        $region29: #{tpu_custom_call.1} parent=27 // pred_check
          %p186 = pneg %p57
        $region30: #{tpu_custom_call.1} parent=27 // pred_check_branch
          %188 = sbr.rel (%p186) target = $region32
        $region31: #{tpu_custom_call.1} parent=27 // pred_region
          %189 = dma.done %s182, 1024
        $region32: #{tpu_custom_call.1} parent=27 // pred_fallthru
          _
        %s190 = sand.u32 %s70, 1
        %s191 = scalar_lea.sflag [#allocation6], %s190
        %s192 = sand.u32 %s70, 1
        %s193 = smul.addr %s192, 64
        %s194 = scalar_lea.vmem [#allocation5], %s193
        // Predicated region
        $region33: #{tpu_custom_call.1} parent=27 // pred_check
          %p195 = pneg %p83
        $region34: #{tpu_custom_call.1} parent=27 // pred_check_branch
          %197 = sbr.rel (%p195) target = $region36
        $region35: #{tpu_custom_call.1} parent=27 // pred_region
          %198 = dma.done %s191, 1024
        $region36: #{tpu_custom_call.1} parent=27 // pred_fallthru
          _
        %s199 = sand.u32 %s44, 1
        %s200 = scalar_lea.sflag [#allocation3], %s199
        %s201 = sand.u32 %s44, 1
        %s202 = smul.addr %s201, 64
        %s203 = scalar_lea.vmem [#allocation2], %s202
        %p204 = pneg %p57
        %p205 = pneg %p54
        %s206 = sand.u32 %s70, 1
        %s207 = scalar_lea.sflag [#allocation6], %s206
        %s208 = sand.u32 %s70, 1
        %s209 = smul.addr %s208, 64
        %s210 = scalar_lea.vmem [#allocation5], %s209
        %p211 = pneg %p83
        %p212 = pneg %p80
        %p213 = pneg %p111
        %p214 = pneg %p108
        %s215 = sand.u32 %s98, 1
        %s216 = scalar_lea.sflag [#allocation4], %s215
        %s217 = sand.u32 %s98, 1
        %s218 = smul.addr %s217, 64
        %s219 = scalar_lea.vmem [#allocation7], %s218
        %s220 = smul.u32 8, %s26
        %s221 = smul.u32 8, %s26
        %s222 = smul.u32 8, %s26
        %v223 = vld [vmem:[%s185] sm:$0xff]
        %v224 = vld [vmem:[%s185 + $0x8] sm:$0xff]
        %v225 = vld [vmem:[%s185 + $0x10] sm:$0xff]
        %v226 = vld [vmem:[%s185 + $0x18] sm:$0xff]
        %v227 = vld [vmem:[%s185 + $0x20] sm:$0xff]
        %v228 = vld [vmem:[%s185 + $0x28] sm:$0xff]
        %v229 = vld [vmem:[%s185 + $0x30] sm:$0xff]
        %v230 = vld [vmem:[%s185 + $0x38] sm:$0xff]
        %v231 = vmul.f32 %v223, 11.313708
        %v232 = vmul.f32 %v224, 11.313708
        %v233 = vmul.f32 %v225, 11.313708
        %v234 = vmul.f32 %v226, 11.313708
        %v235 = vmul.f32 %v227, 11.313708
        %v236 = vmul.f32 %v228, 11.313708
        %v237 = vmul.f32 %v229, 11.313708
        %v238 = vmul.f32 %v230, 11.313708
        %v239 = vld [vmem:[%s194] sm:$0xff]
        %v240 = vld [vmem:[%s194 + $0x8] sm:$0xff]
        %v241 = vld [vmem:[%s194 + $0x10] sm:$0xff]
        %v242 = vld [vmem:[%s194 + $0x18] sm:$0xff]
        %v243 = vld [vmem:[%s194 + $0x20] sm:$0xff]
        %v244 = vld [vmem:[%s194 + $0x28] sm:$0xff]
        %v245 = vld [vmem:[%s194 + $0x30] sm:$0xff]
        %v246 = vld [vmem:[%s194 + $0x38] sm:$0xff]
        %v247 = vadd.f32 %v231, %v239
        %v248 = vadd.f32 %v232, %v240
        %v249 = vadd.f32 %v233, %v241
        %v250 = vadd.f32 %v234, %v242
        %v251 = vadd.f32 %v235, %v243
        %v252 = vadd.f32 %v236, %v244
        %v253 = vadd.f32 %v237, %v245
        %v254 = vadd.f32 %v238, %v246
        %255 = vst [vmem:[%s219] sm:$0xff] %v247
        %256 = vst [vmem:[%s219 + $0x8] sm:$0xff] %v248
        %257 = vst [vmem:[%s219 + $0x10] sm:$0xff] %v249
        %258 = vst [vmem:[%s219 + $0x18] sm:$0xff] %v250
        %259 = vst [vmem:[%s219 + $0x20] sm:$0xff] %v251
        %260 = vst [vmem:[%s219 + $0x28] sm:$0xff] %v252
        %261 = vst [vmem:[%s219 + $0x30] sm:$0xff] %v253
        %262 = vst [vmem:[%s219 + $0x38] sm:$0xff] %v254
        %s263 = sand.u32 %s98, 1
        %s264 = scalar_lea.sflag [#allocation4], %s263
        %s265 = sand.u32 %s98, 1
        %s266 = smul.addr %s265, 64
        %s267 = scalar_lea.vmem [#allocation7], %s266
        // Predicated region
        $region37: #{tpu_custom_call.1} parent=27 // pred_check
          %p268 = pneg %p108
        $region38: #{tpu_custom_call.1} parent=27 // pred_check_branch
          %270 = sbr.rel (%p268) target = $region40
        $region39: #{tpu_custom_call.1} parent=27 // pred_region
          %s271 = smul.u32 8, %s26
          %s273 = ssub.s32 1024, 1024
          %274 = vsyncadd %s264, %s273
          %s275 = smul.addr %s27, 32
          %s276 = sadd.s32 %s271, %s275
          %s277 = smul.addr %s276, 128
          %s278 = scalar_lea.hbm %s2, %s277
          %s279 = sshll.u32 %s267, 4
          %s280 = int_to_ptr.vmem [resolvable:$true] %s279
          %285 = dma.vmem_to_hbm [thread:$0]  %s280, 1024, %s278, %s264, 128, 128, 8
        $region40: #{tpu_custom_call.1} parent=27 // pred_fallthru
          _
      $region28: #{tpu_custom_call.1} parent=5 // pred_fallthru
        _
      %p286 = scmp.le.s32.totalorder 2, %s17
      // Predicated region
      $region41: #{tpu_custom_call.1} parent=5 // pred_check
        %p287 = pneg %p286
      $region42: #{tpu_custom_call.1} parent=5 // pred_check_branch
        %289 = sbr.rel (%p287) target = $region44
      $region43: #{tpu_custom_call.1} parent=5 // pred_region
        %s290 = ssub.s32 %s17, 2
        // Predicated region
        $region45: #{tpu_custom_call.1} parent=43 // pred_check
          %p291 = pneg %p114
        $region46: #{tpu_custom_call.1} parent=43 // pred_check_branch
          %293 = sbr.rel (%p291) target = $region48
        $region47: #{tpu_custom_call.1} parent=43 // pred_region
          %s294 = sand.u32 %s99, 1
          %s295 = scalar_lea.sflag [#allocation4], %s294
          %s296 = sand.u32 %s99, 1
          %s297 = smul.addr %s296, 64
          %s298 = scalar_lea.vmem [#allocation7], %s297
          %299 = dma.done %s295, 1024
        $region48: #{tpu_custom_call.1} parent=43 // pred_fallthru
          _
      $region44: #{tpu_custom_call.1} parent=5 // pred_fallthru
        _
    $region6: #{tpu_custom_call.1} parent=1 // loop_footer
      %s21 = sadd.s32 1, %s17
    $region7: #{tpu_custom_call.1} parent=1 // loop_footer_branch
      %16 = sbr.rel target = $region3
    $region8: #{tpu_custom_call.1} parent=1 // loop_exit
      _
    %300 = vsyncpa [#allocation3], 1
    %s301 = scalar_lea.sflag [#allocation3], 1
    %302 = vsyncpa %s301, 1
    %303 = vsyncpa [#allocation6], 1
    %s304 = scalar_lea.sflag [#allocation6], 1
    %305 = vsyncpa %s304, 1
    %306 = vsyncpa [#allocation4], 1
    %s307 = scalar_lea.sflag [#allocation4], 1
    %308 = vsyncpa %s307, 1

</llo_original>
